<compile_context>
chip_gen: v6e
topology: v6e:2x2x1
jax: 0.10.0
libtpu: 0.0.40
codegen_flags: <defaults>
</compile_context>

<pallas_src>
import math
from functools import partial

import jax
import jax.numpy as jnp
from jax.experimental import pallas as pl
from jax.experimental.pallas import tpu as pltpu


def _attn_dropout_kernel(q_ref, k_ref, v_ref, bits_ref, o_ref, *, c, threshold):
    # q @ k^T over the batched block: (Bt, S, D) x (Bt, S, D) -> (Bt, S, S)
    s = jnp.einsum(
        "bqd,bkd->bqk", q_ref[...], k_ref[...],
        preferred_element_type=jnp.float32,
    )
    # Dropout: keep iff bits >= threshold  (P[drop] = threshold / 2^32 ~= p).
    # scale_factor/(1-p) is folded into the single constant `c`.
    keep = bits_ref[...] >= jnp.uint32(threshold)
    s = jnp.where(keep, s * jnp.float32(c), jnp.float32(0.0))
    # x @ v -> (Bt, S, D)
    o_ref[...] = jnp.einsum(
        "bqk,bkd->bqd", s, v_ref[...],
        preferred_element_type=jnp.float32,
    )


def _attn_kernel(q_ref, k_ref, v_ref, o_ref, *, scale):
    # Eval / p == 0 fast path: no PRNG, no mask.
    s = jnp.einsum(
        "bqd,bkd->bqk", q_ref[...], k_ref[...],
        preferred_element_type=jnp.float32,
    ) * jnp.float32(scale)
    o_ref[...] = jnp.einsum(
        "bqk,bkd->bqd", s, v_ref[...],
        preferred_element_type=jnp.float32,
    )


def model_forward(q, k, v, scale_factor, dropout_p, *, key=None, training=True):
    """Forward pass matching Model.forward (train-mode dropout semantics)."""
    B, S, D = q.shape
    scale_factor = float(scale_factor)
    dropout_p = float(dropout_p)
    apply_dropout = training and dropout_p > 0.0

    # p >= 1.0: everything is dropped (torch would also produce an all-zero
    # output in the p==1 limit); avoid the 1/(1-p) singularity.
    if apply_dropout and dropout_p >= 1.0:
        return jnp.zeros((B, S, D), jnp.float32)

    # Amortize per-grid-step overhead over several batch elements.
    block_b = math.gcd(B, 8) if B > 0 else 1
    grid = (B // block_b,)

    qkv_spec = pl.BlockSpec((block_b, S, D), lambda b: (b, 0, 0))
    out_spec = pl.BlockSpec((block_b, S, D), lambda b: (b, 0, 0))
    cparams = pltpu.CompilerParams(dimension_semantics=("parallel",))
    out_shape = jax.ShapeDtypeStruct((B, S, D), jnp.float32)

    if not apply_dropout:
        kernel = partial(_attn_kernel, scale=scale_factor)
        return pl.pallas_call(
            kernel,
            out_shape=out_shape,
            grid=grid,
            in_specs=[qkv_spec, qkv_spec, qkv_spec],
            out_specs=out_spec,
            compiler_params=cparams,
        )(q, k, v)

    # Training-mode dropout: host-generated uniform uint32 bits, in-kernel
    # integer-threshold compare.  New key per call => new mask per call.
    if key is None:
        key = jax.random.PRNGKey(0)
    bits = jax.random.bits(key, (B, S, S), dtype=jnp.uint32)
    threshold = min(int(round(dropout_p * (2.0 ** 32))), 2 ** 32 - 1)
    c = scale_factor / (1.0 - dropout_p)  # folded scale * 1/(1-p)

    kernel = partial(_attn_dropout_kernel, c=c, threshold=threshold)
    bits_spec = pl.BlockSpec((block_b, S, S), lambda b: (b, 0, 0))

    return pl.pallas_call(
        kernel,
        out_shape=out_shape,
        grid=grid,
        in_specs=[qkv_spec, qkv_spec, qkv_spec, bits_spec],
        out_specs=out_spec,
        compiler_params=cparams,
    )(q, k, v, bits)


if __name__ == "__main__":
    # Shapes from the module's globals: q, k, v = (1, 32, 64)
    key = jax.random.PRNGKey(0)
    kq, kk, kv, kdrop = jax.random.split(key, 4)
    q = jax.random.normal(kq, (1, 32, 64), dtype=jnp.float32)
    k = jax.random.normal(kk, (1, 32, 64), dtype=jnp.float32)
    v = jax.random.normal(kv, (1, 32, 64), dtype=jnp.float32)

    scale_factor = 20.0
    dropout_p = 0.1

    # Training-mode forward (stochastic dropout, as in the torch module).
    out_train = model_forward(q, k, v, scale_factor, dropout_p,
                              key=kdrop, training=True)
    out_train = jax.block_until_ready(out_train)
    assert out_train.shape == (1, 32, 64) and out_train.dtype == jnp.float32
    assert bool(jnp.all(jnp.isfinite(out_train)))

    # Eval-mode fast path (dropout is identity): check against a pure-JAX ref.
    out_eval = model_forward(q, k, v, scale_factor, dropout_p, training=False)
    out_eval = jax.block_until_ready(out_eval)
    ref = jnp.einsum("bqk,bkd->bqd",
                     jnp.einsum("bqd,bkd->bqk", q, k) * scale_factor, v)
    assert bool(jnp.allclose(out_eval, ref, rtol=1e-5, atol=1e-4))

    print("KERNEL_OK")
</pallas_src>

<mosaic_0001>
module attributes {stable_mosaic.version = 11 : i64} {
  func.func @_attn_dropout_kernel(%arg0: i32, %arg1: memref<1x32x64xf32, #tpu.memory_space<vmem>>, %arg2: memref<1x32x64xf32, #tpu.memory_space<vmem>>, %arg3: memref<1x32x64xf32, #tpu.memory_space<vmem>>, %arg4: memref<1x32x32xi32, #tpu.memory_space<vmem>>, %arg5: memref<1x32x64xf32, #tpu.memory_space<vmem>>) attributes {dimension_semantics = [#tpu.dimension_semantics<parallel>], iteration_bounds = array<i64: 1>, scalar_prefetch = 0 : i64, scratch_operands = 0 : i64, tpu.core_type = #tpu.core_type<tc>, window_params = [{transform_indices = @transform_0, window_bounds = array<i64: 1, 32, 64>}, {transform_indices = @transform_1, window_bounds = array<i64: 1, 32, 64>}, {transform_indices = @transform_2, window_bounds = array<i64: 1, 32, 64>}, {transform_indices = @transform_3, window_bounds = array<i64: 1, 32, 32>}, {transform_indices = @transform_4, window_bounds = array<i64: 1, 32, 64>}]} {
    %c0 = arith.constant 0 : index
    %c0_0 = arith.constant 0 : index
    %c0_1 = arith.constant 0 : index
    %0 = vector.load %arg1[%c0, %c0_0, %c0_1] : memref<1x32x64xf32, #tpu.memory_space<vmem>>, vector<1x32x64xf32>
    %c0_2 = arith.constant 0 : index
    %c0_3 = arith.constant 0 : index
    %c0_4 = arith.constant 0 : index
    %1 = vector.load %arg2[%c0_2, %c0_3, %c0_4] : memref<1x32x64xf32, #tpu.memory_space<vmem>>, vector<1x32x64xf32>
    "tpu.trace_start"() <{level = 10 : i32, message = "bqd,bkd->bqk"}> : () -> ()
    %cst = arith.constant dense<0.000000e+00> : vector<1x32x32xf32>
    %2 = tpu.matmul %0, %1, %cst {dimension_numbers = #tpu.dot_dimension_numbers<[2], [2], [1], [1], [0, 0, 0, 1, 1, 1], [0], [0]>} : vector<1x32x64xf32>, vector<1x32x64xf32>, vector<1x32x32xf32> -> vector<1x32x32xf32>
    "tpu.trace_stop"() : () -> ()
    %c0_5 = arith.constant 0 : index
    %c0_6 = arith.constant 0 : index
    %c0_7 = arith.constant 0 : index
    %3 = vector.load %arg4[%c0_5, %c0_6, %c0_7] : memref<1x32x32xi32, #tpu.memory_space<vmem>>, vector<1x32x32xi32>
    %c429496730_i32 = arith.constant 429496730 : i32
    %4 = vector.broadcast %c429496730_i32 : i32 to vector<1x32x32xi32>
    %5 = arith.cmpi uge, %3, %4 : vector<1x32x32xi32>
    %cst_8 = arith.constant 22.2222214 : f32
    %6 = vector.broadcast %cst_8 : f32 to vector<1x32x32xf32>
    %7 = arith.mulf %2, %6 : vector<1x32x32xf32>
    %cst_9 = arith.constant 0.000000e+00 : f32
    %8 = vector.broadcast %cst_9 : f32 to vector<1x32x32xf32>
    %9 = arith.select %5, %7, %8 : vector<1x32x32xi1>, vector<1x32x32xf32>
    %c0_10 = arith.constant 0 : index
    %c0_11 = arith.constant 0 : index
    %c0_12 = arith.constant 0 : index
    %10 = vector.load %arg3[%c0_10, %c0_11, %c0_12] : memref<1x32x64xf32, #tpu.memory_space<vmem>>, vector<1x32x64xf32>
    "tpu.trace_start"() <{level = 10 : i32, message = "bqk,bkd->bqd"}> : () -> ()
    %cst_13 = arith.constant dense<0.000000e+00> : vector<1x32x64xf32>
    %11 = tpu.matmul %9, %10, %cst_13 {dimension_numbers = #tpu.dot_dimension_numbers<[2], [1], [1], [2], [0, 0, 0, 1, 1, 2], [0], [0]>} : vector<1x32x32xf32>, vector<1x32x64xf32>, vector<1x32x64xf32> -> vector<1x32x64xf32>
    "tpu.trace_stop"() : () -> ()
    %c0_14 = arith.constant 0 : index
    %c0_15 = arith.constant 0 : index
    %c0_16 = arith.constant 0 : index
    %12 = vector.load %arg5[%c0_14, %c0_15, %c0_16] : memref<1x32x64xf32, #tpu.memory_space<vmem>>, vector<1x32x64xf32>
    tpu.vector_store %arg5[%c0_14, %c0_15, %c0_16], %11 {strides = array<i32>} : memref<1x32x64xf32, #tpu.memory_space<vmem>>, vector<1x32x64xf32>,
    return
  }
  func.func @transform_0(%arg0: i32) -> (i32, i32, i32) {
    %c0_i32 = arith.constant 0 : i32
    %c0_i32_0 = arith.constant 0 : i32
    %c0_i32_1 = arith.constant 0 : i32
    return %arg0, %c0_i32, %c0_i32_0 : i32, i32, i32
  }
  func.func @transform_1(%arg0: i32) -> (i32, i32, i32) {
    %c0_i32 = arith.constant 0 : i32
    %c0_i32_0 = arith.constant 0 : i32
    %c0_i32_1 = arith.constant 0 : i32
    return %arg0, %c0_i32, %c0_i32_0 : i32, i32, i32
  }
  func.func @transform_2(%arg0: i32) -> (i32, i32, i32) {
    %c0_i32 = arith.constant 0 : i32
    %c0_i32_0 = arith.constant 0 : i32
    %c0_i32_1 = arith.constant 0 : i32
    return %arg0, %c0_i32, %c0_i32_0 : i32, i32, i32
  }
  func.func @transform_3(%arg0: i32) -> (i32, i32, i32) {
    %c0_i32 = arith.constant 0 : i32
    %c0_i32_0 = arith.constant 0 : i32
    %c0_i32_1 = arith.constant 0 : i32
    return %arg0, %c0_i32, %c0_i32_0 : i32, i32, i32
  }
  func.func @transform_4(%arg0: i32) -> (i32, i32, i32) {
    %c0_i32 = arith.constant 0 : i32
    %c0_i32_0 = arith.constant 0 : i32
    %c0_i32_1 = arith.constant 0 : i32
    return %arg0, %c0_i32, %c0_i32_0 : i32, i32, i32
  }
}

</mosaic_0001>

<llo_original>
// kernel: tpu_custom_call.1
$region0: #{tpu_custom_call.1}
  #allocation0 [shape = 'u32[]', space=smem, size = 0x4, offset = 0x4, fixed_abs, tag = 'smem constant byte address 0x4 - core index']
  #allocation1 [shape = 'u32[144,128]{1,0:T(1,128)}', space=vmem, size = 0x12000, scoped, tag = 'internal scratch']
  %s0 = inlined_call_operand.hbm [shape: f32[1,32,64], index: 0, kind: input, shape index: {}]
  %s1 = inlined_call_operand.hbm [shape: f32[1,32,64], index: 1, kind: input, shape index: {}]
  %s2 = inlined_call_operand.hbm [shape: f32[1,32,64], index: 2, kind: input, shape index: {}]
  %s3 = inlined_call_operand.hbm [shape: u32[1,32,32], index: 3, kind: input, shape index: {}]
  %s4 = inlined_call_operand.hbm [shape: f32[1,32,64], index: 4, kind: output, shape index: {}]
  %s5 = sld [smem:[#allocation0]]
  $region42: #{tpu_custom_call.1} parent=0
    _
  %s7 = ssub.s32 1, %s5
  %s8 = scalar_select 0, %s7, %s5
  $region1: #{tpu_custom_call.1} parent=0
    #allocation2 [shape = 'u8[16384]{0}', space=vmem, size = 0x4000, scoped, tag = 'input window, operand 0, single buffered']
    #allocation3 [shape = 's32[1]{0}', space=sflag, size = 0x4, scoped, tag = 'scoped memory for tpu_custom_call.1']
    #allocation4 [shape = 's32[1]{0}', space=sflag, size = 0x4, scoped, tag = 'scoped memory for tpu_custom_call.1']
    #allocation5 [shape = 'u8[16384]{0}', space=vmem, size = 0x4000, scoped, tag = 'input window, operand 1, single buffered']
    #allocation6 [shape = 's32[1]{0}', space=sflag, size = 0x4, scoped, tag = 'scoped memory for tpu_custom_call.1']
    #allocation7 [shape = 'u8[16384]{0}', space=vmem, size = 0x4000, scoped, tag = 'input window, operand 2, single buffered']
    #allocation8 [shape = 'u8[16384]{0}', space=vmem, size = 0x4000, scoped, tag = 'input window, operand 3, single buffered']
    #allocation9 [shape = 's32[1]{0}', space=sflag, size = 0x4, scoped, tag = 'scoped memory for tpu_custom_call.1']
    #allocation10 [shape = 'u8[16384]{0}', space=vmem, size = 0x4000, scoped, tag = 'output window, operand 0, single buffered']
    %9 = vsyncpa [#allocation3], 0
    %10 = vsyncpa [#allocation6], 0
    %11 = vsyncpa [#allocation9], 0
    %12 = vsyncpa [#allocation4], 0
    // Predicated region
    $region2: #{tpu_custom_call.1} parent=1 // pred_check
      _
    $region3: #{tpu_custom_call.1} parent=1 // pred_check_branch
      %14 = sbr.rel (0) target = $region5
    $region4: #{tpu_custom_call.1} parent=1 // pred_region
      %s16 = ssub.s32 512, 512
      %17 = vsyncadd [#allocation3], %s16
      %s18 = sshll.u32 [#allocation2], 4
      %s19 = int_to_ptr.vmem [resolvable:$true] %s18
      %24 = dma.hbm_to_vmem [thread:$0]  %s0, 512, %s19, [#allocation3], 128, 128, 8
    $region5: #{tpu_custom_call.1} parent=1 // pred_fallthru
      _
    // Predicated region
    $region6: #{tpu_custom_call.1} parent=1 // pred_check
      _
    $region7: #{tpu_custom_call.1} parent=1 // pred_check_branch
      %26 = sbr.rel (0) target = $region9
    $region8: #{tpu_custom_call.1} parent=1 // pred_region
      %s28 = ssub.s32 512, 512
      %29 = vsyncadd [#allocation6], %s28
      %s30 = sshll.u32 [#allocation5], 4
      %s31 = int_to_ptr.vmem [resolvable:$true] %s30
      %36 = dma.hbm_to_vmem [thread:$0]  %s1, 512, %s31, [#allocation6], 128, 128, 8
    $region9: #{tpu_custom_call.1} parent=1 // pred_fallthru
      _
    // Predicated region
    $region10: #{tpu_custom_call.1} parent=1 // pred_check
      _
    $region11: #{tpu_custom_call.1} parent=1 // pred_check_branch
      %38 = sbr.rel (0) target = $region13
    $region12: #{tpu_custom_call.1} parent=1 // pred_region
      %s40 = ssub.s32 512, 512
      %41 = vsyncadd [#allocation6], %s40
      %s42 = sshll.u32 [#allocation7], 4
      %s43 = int_to_ptr.vmem [resolvable:$true] %s42
      %48 = dma.hbm_to_vmem [thread:$0]  %s2, 512, %s43, [#allocation6], 128, 128, 8
    $region13: #{tpu_custom_call.1} parent=1 // pred_fallthru
      _
    // Predicated region
    $region14: #{tpu_custom_call.1} parent=1 // pred_check
      _
    $region15: #{tpu_custom_call.1} parent=1 // pred_check_branch
      %50 = sbr.rel (0) target = $region17
    $region16: #{tpu_custom_call.1} parent=1 // pred_region
      %s52 = ssub.s32 512, 512
      %53 = vsyncadd [#allocation9], %s52
      %s54 = sshll.u32 [#allocation8], 4
      %s55 = int_to_ptr.vmem [resolvable:$true] %s54
      %60 = dma.hbm_to_vmem [thread:$0]  %s3, 512, %s55, [#allocation9], 128, 128, 8
    $region17: #{tpu_custom_call.1} parent=1 // pred_fallthru
      _
    // Predicated region
    $region18: #{tpu_custom_call.1} parent=1 // pred_check
      _
    $region19: #{tpu_custom_call.1} parent=1 // pred_check_branch
      %62 = sbr.rel (0) target = $region21
    $region20: #{tpu_custom_call.1} parent=1 // pred_region
      %63 = dma.done [#allocation3], 512
    $region21: #{tpu_custom_call.1} parent=1 // pred_fallthru
      _
    // Predicated region
    $region22: #{tpu_custom_call.1} parent=1 // pred_check
      _
    $region23: #{tpu_custom_call.1} parent=1 // pred_check_branch
      %65 = sbr.rel (0) target = $region25
    $region24: #{tpu_custom_call.1} parent=1 // pred_region
      %66 = dma.done [#allocation6], 512
    $region25: #{tpu_custom_call.1} parent=1 // pred_fallthru
      _
    // Predicated region
    $region26: #{tpu_custom_call.1} parent=1 // pred_check
      _
    $region27: #{tpu_custom_call.1} parent=1 // pred_check_branch
      %68 = sbr.rel (0) target = $region29
    $region28: #{tpu_custom_call.1} parent=1 // pred_region
      %69 = dma.done [#allocation6], 512
    $region29: #{tpu_custom_call.1} parent=1 // pred_fallthru
      _
    // Predicated region
    $region30: #{tpu_custom_call.1} parent=1 // pred_check
      _
    $region31: #{tpu_custom_call.1} parent=1 // pred_check_branch
      %71 = sbr.rel (0) target = $region33
    $region32: #{tpu_custom_call.1} parent=1 // pred_region
      %72 = dma.done [#allocation9], 512
    $region33: #{tpu_custom_call.1} parent=1 // pred_fallthru
      _
    %v73 = vld [vmem:[#allocation2] sm:$0xff]
    %v74 = vld [vmem:[#allocation2 + $0x8] sm:$0xff]
    %v75 = vld [vmem:[#allocation2 + $0x10] sm:$0xff]
    %v76 = vld [vmem:[#allocation2 + $0x18] sm:$0xff]
    %v77 = vld [vmem:[#allocation5] sm:$0xff]
    %v78 = vld [vmem:[#allocation5 + $0x8] sm:$0xff]
    %v79 = vld [vmem:[#allocation5 + $0x10] sm:$0xff]
    %v80 = vld [vmem:[#allocation5 + $0x18] sm:$0xff]
    %vm81 = vcmask 523264
    %v83 = vsel %vm81, %v73, 0
    %v86 = vsel %vm81, %v74, 0
    %v89 = vsel %vm81, %v75, 0
    %v92 = vsel %vm81, %v76, 0
    %v95 = vsel %vm81, %v77, 0
    %v98 = vsel %vm81, %v78, 0
    %v101 = vsel %vm81, %v79, 0
    %v104 = vsel %vm81, %v80, 0
    %106 = vmatprep.subr.mxu0 0.0
    %107 = vmatpush1.xpose.msra.mxu0 0.0
    %108 = vmatprep.subr.mxu0 0.0
    %109 = vmatpush1.xpose.msra.mxu0 0.0
    %110 = vmatprep.subr.mxu0 0.0
    %111 = vmatpush1.xpose.msra.mxu0 0.0
    %112 = vmatprep.subr.mxu0 0.0
    %113 = vmatpush1.xpose.msra.mxu0 0.0
    %114 = vmatprep.subr.mxu0 0.0
    %115 = vmatpush1.xpose.msra.mxu0 0.0
    %116 = vmatprep.subr.mxu0 0.0
    %117 = vmatpush1.xpose.msra.mxu0 0.0
    %118 = vmatprep.subr.mxu0 0.0
    %119 = vmatpush1.xpose.msra.mxu0 0.0
    %120 = vmatprep.subr.mxu0 0.0
    %121 = vmatpush1.xpose.msra.mxu0 0.0
    %122 = vmatprep.subr.mxu0 0.0
    %123 = vmatpush1.xpose.msra.mxu0 0.0
    %124 = vmatprep.subr.mxu0 0.0
    %125 = vmatpush1.xpose.msra.mxu0 0.0
    %126 = vmatprep.subr.mxu0 0.0
    %127 = vmatpush1.xpose.msra.mxu0 0.0
    %128 = vmatprep.subr.mxu0 0.0
    %129 = vmatpush1.xpose.msra.mxu0 0.0
    %130 = vmatprep.subr.mxu0 0.0
    %131 = vmatpush1.xpose.msra.mxu0 %v104
    %132 = vmatprep.subr.mxu0 0.0
    %133 = vmatpush1.xpose.msra.mxu0 %v101
    %134 = vmatprep.subr.mxu0 0.0
    %135 = vmatpush1.xpose.msra.mxu0 %v98
    %136 = vmatprep.subr.mxu0 0.0
    %137 = vmatpush1.xpose.msra.mxu0 %v95
    %138 = vmatprep.subr.mxu0 0.0
    %139 = vmatpush2.xpose.msra.mxu0 0.0
    %140 = vmatprep.subr.mxu0 0.0
    %141 = vmatpush2.xpose.msra.mxu0 0.0
    %142 = vmatprep.subr.mxu0 0.0
    %143 = vmatpush2.xpose.msra.mxu0 0.0
    %144 = vmatprep.subr.mxu0 0.0
    %145 = vmatpush2.xpose.msra.mxu0 0.0
    %146 = vmatprep.subr.mxu0 0.0
    %147 = vmatpush2.xpose.msra.mxu0 0.0
    %148 = vmatprep.subr.mxu0 0.0
    %149 = vmatpush2.xpose.msra.mxu0 0.0
    %150 = vmatprep.subr.mxu0 0.0
    %151 = vmatpush2.xpose.msra.mxu0 0.0
    %152 = vmatprep.subr.mxu0 0.0
    %153 = vmatpush2.xpose.msra.mxu0 0.0
    %154 = vmatprep.subr.mxu0 0.0
    %155 = vmatpush2.xpose.msra.mxu0 0.0
    %156 = vmatprep.subr.mxu0 0.0
    %157 = vmatpush2.xpose.msra.mxu0 0.0
    %158 = vmatprep.subr.mxu0 0.0
    %159 = vmatpush2.xpose.msra.mxu0 0.0
    %160 = vmatprep.subr.mxu0 0.0
    %161 = vmatpush2.xpose.msra.mxu0 0.0
    %162 = vmatprep.subr.mxu0 0.0
    %163 = vmatpush2.xpose.msra.mxu0 0.0
    %164 = vmatprep.subr.mxu0 0.0
    %165 = vmatpush2.xpose.msra.mxu0 0.0
    %166 = vmatprep.subr.mxu0 0.0
    %167 = vmatpush2.xpose.msra.mxu0 0.0
    %168 = vmatprep.subr.mxu0 0.0
    %169 = vmatpush2.xpose.msra.mxu0 0.0
    %170 = vmatprep.mubr.f32.mxu0 0.0
    %171 = vmatmul.mubr.f32.gmra.mxu0 %v83
    %v172 = vpop.f32.mrf.mxu0
    %v173 = vadd.f32 0.0, %v172
    %v174 = vpop.f32.mrf.mxu0
    %175 = vmatprep.mubr.f32.mxu0 0.0
    %176 = vmatmul.mubr.f32.gmra.mxu0 %v86
    %v177 = vpop.f32.mrf.mxu0
    %v178 = vadd.f32 0.0, %v177
    %v179 = vpop.f32.mrf.mxu0
    %180 = vmatprep.mubr.f32.mxu0 0.0
    %181 = vmatmul.mubr.f32.gmra.mxu0 %v89
    %v182 = vpop.f32.mrf.mxu0
    %v183 = vadd.f32 0.0, %v182
    %v184 = vpop.f32.mrf.mxu0
    %185 = vmatprep.mubr.f32.mxu0 0.0
    %186 = vmatmul.mubr.f32.gmra.mxu0 %v92
    %v187 = vpop.f32.mrf.mxu0
    %v188 = vadd.f32 0.0, %v187
    %v189 = vpop.f32.mrf.mxu0
    %190 = vdwg.mxu0
    %v191 = vld [vmem:[#allocation8] sm:$0xff]
    %v192 = vld [vmem:[#allocation8 + $0x8] sm:$0xff]
    %v193 = vld [vmem:[#allocation8 + $0x10] sm:$0xff]
    %v194 = vld [vmem:[#allocation8 + $0x18] sm:$0xff]
    %vm195 = vcmp.ge.u32.totalorder %v191, 429496730
    %vm196 = vcmp.ge.u32.totalorder %v192, 429496730
    %vm197 = vcmp.ge.u32.totalorder %v193, 429496730
    %vm198 = vcmp.ge.u32.totalorder %v194, 429496730
    %v199 = vmul.f32 %v173, 22.222221
    %v200 = vmul.f32 %v178, 22.222221
    %v201 = vmul.f32 %v183, 22.222221
    %v202 = vmul.f32 %v188, 22.222221
    %v203 = vsel %vm195, %v199, 0.0
    %v204 = vsel %vm196, %v200, 0.0
    %v205 = vsel %vm197, %v201, 0.0
    %v206 = vsel %vm198, %v202, 0.0
    %v207 = vld [vmem:[#allocation7] sm:$0xff]
    %v208 = vld [vmem:[#allocation7 + $0x8] sm:$0xff]
    %v209 = vld [vmem:[#allocation7 + $0x10] sm:$0xff]
    %v210 = vld [vmem:[#allocation7 + $0x18] sm:$0xff]
    %vm211 = vcmask 261120
    %v213 = vsel %vm211, %v203, 0
    %v216 = vsel %vm211, %v204, 0
    %v219 = vsel %vm211, %v205, 0
    %v222 = vsel %vm211, %v206, 0
    %224 = vmatprep.subr.mxu0 0.0
    %225 = vmatpush1.msra.mxu0 0.0
    %226 = vmatprep.subr.mxu0 0.0
    %227 = vmatpush1.msra.mxu0 0.0
    %228 = vmatprep.subr.mxu0 0.0
    %229 = vmatpush1.msra.mxu0 0.0
    %230 = vmatprep.subr.mxu0 0.0
    %231 = vmatpush1.msra.mxu0 0.0
    %232 = vmatprep.subr.mxu0 0.0
    %233 = vmatpush1.msra.mxu0 0.0
    %234 = vmatprep.subr.mxu0 0.0
    %235 = vmatpush1.msra.mxu0 0.0
    %236 = vmatprep.subr.mxu0 0.0
    %237 = vmatpush1.msra.mxu0 0.0
    %238 = vmatprep.subr.mxu0 0.0
    %239 = vmatpush1.msra.mxu0 0.0
    %240 = vmatprep.subr.mxu0 0.0
    %241 = vmatpush1.msra.mxu0 0.0
    %242 = vmatprep.subr.mxu0 0.0
    %243 = vmatpush1.msra.mxu0 0.0
    %244 = vmatprep.subr.mxu0 0.0
    %245 = vmatpush1.msra.mxu0 0.0
    %246 = vmatprep.subr.mxu0 0.0
    %247 = vmatpush1.msra.mxu0 0.0
    %248 = vmatprep.subr.mxu0 0.0
    %249 = vmatpush1.msra.mxu0 %v210
    %250 = vmatprep.subr.mxu0 0.0
    %251 = vmatpush1.msra.mxu0 %v209
    %252 = vmatprep.subr.mxu0 0.0
    %253 = vmatpush1.msra.mxu0 %v208
    %254 = vmatprep.subr.mxu0 0.0
    %255 = vmatpush1.msra.mxu0 %v207
    %256 = vmatprep.subr.mxu0 0.0
    %257 = vmatpush2.msra.mxu0 0.0
    %258 = vmatprep.subr.mxu0 0.0
    %259 = vmatpush2.msra.mxu0 0.0
    %260 = vmatprep.subr.mxu0 0.0
    %261 = vmatpush2.msra.mxu0 0.0
    %262 = vmatprep.subr.mxu0 0.0
    %263 = vmatpush2.msra.mxu0 0.0
    %264 = vmatprep.subr.mxu0 0.0
    %265 = vmatpush2.msra.mxu0 0.0
    %266 = vmatprep.subr.mxu0 0.0
    %267 = vmatpush2.msra.mxu0 0.0
    %268 = vmatprep.subr.mxu0 0.0
    %269 = vmatpush2.msra.mxu0 0.0
    %270 = vmatprep.subr.mxu0 0.0
    %271 = vmatpush2.msra.mxu0 0.0
    %272 = vmatprep.subr.mxu0 0.0
    %273 = vmatpush2.msra.mxu0 0.0
    %274 = vmatprep.subr.mxu0 0.0
    %275 = vmatpush2.msra.mxu0 0.0
    %276 = vmatprep.subr.mxu0 0.0
    %277 = vmatpush2.msra.mxu0 0.0
    %278 = vmatprep.subr.mxu0 0.0
    %279 = vmatpush2.msra.mxu0 0.0
    %280 = vmatprep.subr.mxu0 0.0
    %281 = vmatpush2.msra.mxu0 0.0
    %282 = vmatprep.subr.mxu0 0.0
    %283 = vmatpush2.msra.mxu0 0.0
    %284 = vmatprep.subr.mxu0 0.0
    %285 = vmatpush2.msra.mxu0 0.0
    %286 = vmatprep.subr.mxu0 0.0
    %287 = vmatpush2.msra.mxu0 0.0
    %288 = vmatprep.mubr.f32.mxu0 0.0
    %289 = vmatmul.mubr.f32.gmra.mxu0 %v213
    %v290 = vpop.f32.mrf.mxu0
    %v291 = vadd.f32 0.0, %v290
    %v292 = vpop.f32.mrf.mxu0
    %293 = vmatprep.mubr.f32.mxu0 0.0
    %294 = vmatmul.mubr.f32.gmra.mxu0 %v216
    %v295 = vpop.f32.mrf.mxu0
    %v296 = vadd.f32 0.0, %v295
    %v297 = vpop.f32.mrf.mxu0
    %298 = vmatprep.mubr.f32.mxu0 0.0
    %299 = vmatmul.mubr.f32.gmra.mxu0 %v219
    %v300 = vpop.f32.mrf.mxu0
    %v301 = vadd.f32 0.0, %v300
    %v302 = vpop.f32.mrf.mxu0
    %303 = vmatprep.mubr.f32.mxu0 0.0
    %304 = vmatmul.mubr.f32.gmra.mxu0 %v222
    %v305 = vpop.f32.mrf.mxu0
    %v306 = vadd.f32 0.0, %v305
    %v307 = vpop.f32.mrf.mxu0
    %308 = vdwg.mxu0
    %309 = vst.msk [vmem:[#allocation10] sm:$0xff] %vm81, %v291
    %310 = vst.msk [vmem:[#allocation10 + $0x8] sm:$0xff] %vm81, %v296
    %311 = vst.msk [vmem:[#allocation10 + $0x10] sm:$0xff] %vm81, %v301
    %312 = vst.msk [vmem:[#allocation10 + $0x18] sm:$0xff] %vm81, %v306
    // Predicated region
    $region34: #{tpu_custom_call.1} parent=1 // pred_check
      _
    $region35: #{tpu_custom_call.1} parent=1 // pred_check_branch
      %314 = sbr.rel (0) target = $region37
    $region36: #{tpu_custom_call.1} parent=1 // pred_region
      %s316 = ssub.s32 512, 512
      %317 = vsyncadd [#allocation4], %s316
      %s318 = sshll.u32 [#allocation10], 4
      %s319 = int_to_ptr.vmem [resolvable:$true] %s318
      %324 = dma.vmem_to_hbm [thread:$0]  %s319, 512, %s4, [#allocation4], 128, 128, 8
    $region37: #{tpu_custom_call.1} parent=1 // pred_fallthru
      _
    // Predicated region
    $region38: #{tpu_custom_call.1} parent=1 // pred_check
      _
    $region39: #{tpu_custom_call.1} parent=1 // pred_check_branch
      %326 = sbr.rel (0) target = $region41
    $region40: #{tpu_custom_call.1} parent=1 // pred_region
      %327 = dma.done [#allocation4], 512
    $region41: #{tpu_custom_call.1} parent=1 // pred_fallthru
      _
    %328 = vsyncpa [#allocation3], 1
    %329 = vsyncpa [#allocation6], 1
    %330 = vsyncpa [#allocation9], 1
    %331 = vsyncpa [#allocation4], 1

</llo_original>
